<compile_context>
chip_gen: v6e
topology: v6e:2x2x1
jax: 0.10.0
libtpu: 0.0.40
codegen_flags: <defaults>
</compile_context>

<pallas_src>
from functools import partial
from typing import Dict, Type, Any, Generic, TypeVar, Callable

import jax
import jax.numpy as jnp
from jax.experimental import pallas as pl
from jax.experimental.pallas import tpu as pltpu

T = TypeVar("T")

_VMEM_BUDGET_BYTES = 48 * 1024 * 1024     # safe on v7x (64 MiB physical), fine on v5e/v6e
_SMALL_DIM_MAX = 512                      # dim_in/dim_out threshold for single-block path
_SMALL_M_MAX = 1024                       # rows threshold for single-block path


# ----------------------------- helpers -------------------------------------

def _round_up(x: int, m: int) -> int:
    return (x + m - 1) // m * m


def _pick_tile(dim: int, target: int, align: int) -> int:
    """Largest multiple of `align` that divides `dim` and is <= target.

    `dim` is assumed to already be a multiple of `align`, so no extra padding is
    ever introduced by the tile choice (avoids over-padding N/K to tile size).
    """
    if dim <= target:
        return dim
    best = align
    t = align
    while t <= target:
        if dim % t == 0:
            best = t
        t += align
    return best


# ----------------------------- Pallas kernels -------------------------------

def _linear_tiled_kernel(x_ref, w_ref, b_ref, o_ref, acc_ref):
    # x_ref: (tm, tk) bf16, w_ref: (tk, tn) bf16, b_ref: (1, tn) f32
    # o_ref: (tm, tn) out dtype, acc_ref: (tm, tn) f32 VMEM scratch
    k = pl.program_id(2)

    @pl.when(k == 0)
    def _():
        # Fold the bias add into the accumulator init (one broadcast per output
        # tile, no extra epilogue VPU pass).
        acc_ref[...] = jnp.broadcast_to(b_ref[...], acc_ref.shape)

    acc_ref[...] += jnp.dot(
        x_ref[...], w_ref[...], preferred_element_type=jnp.float32
    )

    @pl.when(k == pl.num_programs(2) - 1)
    def _():
        o_ref[...] = acc_ref[...].astype(o_ref.dtype)


def _linear_small_kernel(x_ref, w_ref, b_ref, o_ref):
    # Whole problem in one block: no grid, no padding of K/N to 128 needed
    # (full-dim blocks satisfy the tiling rule). x/w bf16, bias/out f32.
    acc = jnp.dot(x_ref[...], w_ref[...], preferred_element_type=jnp.float32)
    o_ref[...] = (acc + b_ref[...]).astype(o_ref.dtype)


# ----------------------------- wrappers --------------------------------------

@jax.jit
def pallas_linear_small(x2d: jax.Array, w_bf16: jax.Array, b2d: jax.Array) -> jax.Array:
    """Single-block path for small shapes: y = x2d @ W + b, one kernel invocation."""
    M, K = x2d.shape
    K2, N = w_bf16.shape
    assert K == K2
    xb = x2d.astype(jnp.bfloat16)          # fuses into this jitted computation
    return pl.pallas_call(
        _linear_small_kernel,
        out_shape=jax.ShapeDtypeStruct((M, N), x2d.dtype),
        in_specs=[
            pl.BlockSpec(memory_space=pltpu.MemorySpace.VMEM),
            pl.BlockSpec(memory_space=pltpu.MemorySpace.VMEM),
            pl.BlockSpec(memory_space=pltpu.MemorySpace.VMEM),
        ],
        out_specs=pl.BlockSpec(memory_space=pltpu.MemorySpace.VMEM),
    )(xb, w_bf16, b2d)


@partial(jax.jit, static_argnames=("n_out",))
def pallas_linear_tiled(x2d: jax.Array, wp: jax.Array, bp: jax.Array,
                        *, n_out: int) -> jax.Array:
    """Tiled path: y = x2d @ W + b with pre-padded/pre-cast W (wp) and bias (bp).

    x2d: [M, K] f32 (unpadded), wp: [Kp, Np] bf16 (K,N padded to 128), bp: [1, Np] f32.
    Returns [M, n_out] in x2d.dtype.
    """
    M, K = x2d.shape
    Kp, Np = wp.shape
    Mp = _round_up(M, 16)                  # bf16 packs 2 rows/sublane -> 16-row alignment

    # Per-call x pad + cast; lives under jit so it fuses with the kernel dispatch
    # and is compiled once per input shape.
    xp = jnp.pad(x2d, ((0, Mp - M), (0, Kp - K))).astype(jnp.bfloat16)

    # Tiles are divisors of the (minimally) padded dims -> no extra padding.
    tm = _pick_tile(Mp, 512, 16)
    tn = _pick_tile(Np, 512, 128)
    tk = _pick_tile(Kp, 1024, 128)

    # v7x megacore: ensure >=2 parallel blocks exist when the problem allows it,
    # otherwise one TensorCore sits idle (no-op on single-TC v5e/v6e).
    if (Mp // tm) * (Np // tn) < 2:
        if Mp // tm < 2 and Mp >= 32:
            tm = _pick_tile(Mp, max(tm // 2, 16), 16)
        elif Np // tn < 2 and Np >= 256:
            tn = _pick_tile(Np, max(tn // 2, 128), 128)

    grid = (Mp // tm, Np // tn, Kp // tk)

    cost = pl.CostEstimate(
        flops=2 * Mp * Kp * Np,
        transcendentals=0,
        bytes_accessed=(
            xp.size * 2 * (Np // tn)       # x re-streamed once per N block
            + wp.size * 2 * (Mp // tm)     # W re-streamed once per M block
            + bp.size * 4 * (Mp // tm)
            + Mp * Np * 4                  # output written once
        ),
    )

    yp = pl.pallas_call(
        _linear_tiled_kernel,
        out_shape=jax.ShapeDtypeStruct((Mp, Np), x2d.dtype),
        grid=grid,
        in_specs=[
            pl.BlockSpec((tm, tk), lambda i, j, k: (i, k)),   # activations
            pl.BlockSpec((tk, tn), lambda i, j, k: (k, j)),   # weights
            pl.BlockSpec((1, tn), lambda i, j, k: (0, j)),    # bias
        ],
        out_specs=pl.BlockSpec((tm, tn), lambda i, j, k: (i, j)),
        scratch_shapes=[pltpu.VMEM((tm, tn), jnp.float32)],
        compiler_params=pltpu.CompilerParams(
            dimension_semantics=("parallel", "parallel", "arbitrary"),
            vmem_limit_bytes=_VMEM_BUDGET_BYTES,
        ),
        cost_estimate=cost,
    )(xp, wp, bp)

    return yp[:M, :n_out]


# ------------------------ Registry / strategy plumbing ----------------------

class ComponentRegistry(Generic[T]):
    """Universal registry for neural network components (JAX port)."""

    def __init__(self, component_name: str):
        self.component_name = component_name
        self._strategies: Dict[str, Type[T]] = {}
        self._configs: Dict[str, Dict[str, Any]] = {}

    def register(self, name: str, config_fields: Dict[str, Any] = None) -> Callable:
        def decorator(strategy_class):
            self._strategies[name] = strategy_class
            if config_fields:
                self._configs[name] = config_fields
            return strategy_class
        return decorator

    def create_strategy(self, type_name: str, **kwargs) -> T:
        if type_name not in self._strategies:
            raise ValueError(f"Unknown {self.component_name} type: {type_name}")
        return self._strategies[type_name](**kwargs)

    def get_config_fields(self, type_name: str) -> Dict[str, Any]:
        return self._configs.get(type_name, {})

    def get_available_types(self) -> list:
        return list(self._strategies.keys())

    def is_valid_type(self, type_name: str) -> bool:
        return type_name in self._strategies


FEEDFORWARD_REGISTRY: ComponentRegistry = ComponentRegistry("feedforward")


@FEEDFORWARD_REGISTRY.register("linear", config_fields={"dim_in": 32, "dim_out": 32})
class LinearStrategy:
    """Concrete strategy: y = x @ W + b, matmul done in a Pallas TPU kernel."""

    def __init__(self, dim_in: int = 32, dim_out: int = 32, seed: int = 0):
        # Deterministic, in-script parameter init (synthetic weights).
        k_w, k_b = jax.random.split(jax.random.PRNGKey(seed))
        scale = 1.0 / jnp.sqrt(jnp.float32(dim_in))
        self.weight = jax.random.normal(k_w, (dim_in, dim_out), jnp.float32) * scale
        self.bias = jax.random.normal(k_b, (dim_out,), jnp.float32) * 0.01
        self.dim_in, self.dim_out = dim_in, dim_out

        # Hoisted weight preprocessing (done ONCE, not per forward):
        # tiled path: K/N padded to 128 + bf16 cast.
        Kp = _round_up(dim_in, 128)
        Np = _round_up(dim_out, 128)
        self.wp = jnp.pad(self.weight, ((0, Kp - dim_in), (0, Np - dim_out))
                          ).astype(jnp.bfloat16)
        self.bp = jnp.pad(self.bias, (0, Np - dim_out)
                          ).astype(jnp.float32).reshape(1, Np)

        # small single-block path: unpadded bf16 weights (tiny; kept alongside).
        self._small_dims = dim_in <= _SMALL_DIM_MAX and dim_out <= _SMALL_DIM_MAX
        if self._small_dims:
            self.w_bf16 = self.weight.astype(jnp.bfloat16)
            self.b2d = self.bias.astype(jnp.float32).reshape(1, dim_out)

    def apply(self, x: jax.Array, **kwargs) -> jax.Array:
        # x: [batch, seq, dim_in] -> [batch, seq, dim_out]
        B, S, D = x.shape
        x2d = x.reshape(B * S, D)
        if self._small_dims and (B * S) <= _SMALL_M_MAX:
            y2d = pallas_linear_small(x2d, self.w_bf16, self.b2d)
        else:
            y2d = pallas_linear_tiled(x2d, self.wp, self.bp, n_out=self.dim_out)
        return y2d.reshape(B, S, self.dim_out)


class ComponentModule(Generic[T]):
    """Generic main module that uses strategy pattern (JAX port)."""

    def __init__(self, type_name: str, registry: ComponentRegistry[T], **kwargs):
        self.type_name = type_name
        self.registry = registry
        self.strategy = registry.create_strategy(type_name, **kwargs)

    def __call__(self, x: jax.Array, **kwargs) -> jax.Array:
        return self.forward(x, **kwargs)

    def forward(self, x: jax.Array, **kwargs) -> jax.Array:
        """Apply component transformation."""
        return self.strategy.apply(x, **kwargs)


# ------------------------------------ main ----------------------------------

if __name__ == "__main__":
    # TODO(synk): the original module defines no concrete strategy; a "linear"
    # strategy is registered here as the representative forward-pass compute.
    batch, seq, hidden = 2, 8, 32
    key = jax.random.PRNGKey(0)
    x = jax.random.normal(key, (batch, seq, hidden), jnp.float32)

    module = ComponentModule("linear", FEEDFORWARD_REGISTRY,
                             dim_in=hidden, dim_out=hidden, seed=0)

    # Small-shape single-block path (the demo case).
    y = module(x)
    y = jax.block_until_ready(y)

    # Sanity check against a plain-JAX f32 reference (kernel uses bf16 operands
    # with f32 accumulation, so tolerances are bf16-appropriate).
    ref = x.reshape(-1, hidden) @ module.strategy.weight + module.strategy.bias
    ref = ref.reshape(batch, seq, hidden)
    assert y.shape == (batch, seq, hidden)
    assert jnp.allclose(y, ref, atol=2e-2, rtol=2e-2), \
        float(jnp.max(jnp.abs(y - ref)))

    # Also exercise the tiled grid path once (larger M forces it).
    big_bs, big_seq = 8, 160                       # M = 1280 > _SMALL_M_MAX
    xb = jax.random.normal(jax.random.PRNGKey(1), (big_bs, big_seq, hidden), jnp.float32)
    yb = jax.block_until_ready(module(xb))
    refb = (xb.reshape(-1, hidden) @ module.strategy.weight + module.strategy.bias
            ).reshape(big_bs, big_seq, hidden)
    assert jnp.allclose(yb, refb, atol=2e-2, rtol=2e-2), \
        float(jnp.max(jnp.abs(yb - refb)))

    print("KERNEL_OK")
</pallas_src>

<mosaic_0001>
module attributes {stable_mosaic.version = 11 : i64} {
  func.func @_linear_small_kernel(%arg0: memref<16x32xbf16, #tpu.memory_space<vmem>>, %arg1: memref<32x32xbf16, #tpu.memory_space<vmem>>, %arg2: memref<1x32xf32, #tpu.memory_space<vmem>>, %arg3: memref<16x32xf32, #tpu.memory_space<vmem>>) attributes {dimension_semantics = [], scalar_prefetch = 0 : i64, scratch_operands = 0 : i64, tpu.core_type = #tpu.core_type<tc>} {
    %c0 = arith.constant 0 : index
    %c0_0 = arith.constant 0 : index
    %0 = vector.load %arg0[%c0, %c0_0] : memref<16x32xbf16, #tpu.memory_space<vmem>>, vector<16x32xbf16>
    %c0_1 = arith.constant 0 : index
    %c0_2 = arith.constant 0 : index
    %1 = vector.load %arg1[%c0_1, %c0_2] : memref<32x32xbf16, #tpu.memory_space<vmem>>, vector<32x32xbf16>
    %cst = arith.constant dense<0.000000e+00> : vector<16x32xf32>
    %2 = tpu.matmul %0, %1, %cst {dimension_numbers = #tpu.dot_dimension_numbers<[1], [0], [0], [1], [0, 0, 1, 1], [], []>} : vector<16x32xbf16>, vector<32x32xbf16>, vector<16x32xf32> -> vector<16x32xf32>
    %c0_3 = arith.constant 0 : index
    %c0_4 = arith.constant 0 : index
    %3 = vector.load %arg2[%c0_3, %c0_4] : memref<1x32xf32, #tpu.memory_space<vmem>>, vector<1x32xf32>
    %4 = vector.broadcast %3 : vector<1x32xf32> to vector<16x32xf32>
    %5 = arith.addf %2, %4 : vector<16x32xf32>
    %c0_5 = arith.constant 0 : index
    %c0_6 = arith.constant 0 : index
    %6 = vector.load %arg3[%c0_5, %c0_6] : memref<16x32xf32, #tpu.memory_space<vmem>>, vector<16x32xf32>
    tpu.vector_store %arg3[%c0_5, %c0_6], %5 {strides = array<i32>} : memref<16x32xf32, #tpu.memory_space<vmem>>, vector<16x32xf32>,
    return
  }
}

</mosaic_0001>

<llo_original>
// kernel: pallas_linear_small.1
$region0: #{pallas_linear_small.1}
  #allocation0 [shape = 'u32[]', space=smem, size = 0x4, offset = 0x4, fixed_abs, tag = 'smem constant byte address 0x4 - core index']
  #allocation1 [shape = 'u32[144,128]{1,0:T(1,128)}', space=vmem, size = 0x12000, scoped, tag = 'internal scratch']
  %s0 = inlined_call_operand.vmem [shape: bf16[16,32], index: 0, kind: input, shape index: {}]
  %s1 = inlined_call_operand.vmem [shape: bf16[32,32], index: 1, kind: input, shape index: {}]
  %s2 = inlined_call_operand.vmem [shape: f32[1,32], index: 2, kind: input, shape index: {}]
  %s3 = inlined_call_operand.hbm [shape: f32[16,32], index: 3, kind: output, shape index: {}]
  %s4 = sld [smem:[#allocation0]]
  $region22: #{pallas_linear_small.1} parent=0
    _
  %s6 = ssub.s32 1, %s4
  %s7 = scalar_select 0, %s6, %s4
  $region1: #{pallas_linear_small.1} parent=0
    #allocation2 [shape = 'u8[8192]{0}', space=vmem, size = 0x2000, scoped, tag = 'output window, operand 0, single buffered']
    #allocation3 [shape = 's32[1]{0}', space=sflag, size = 0x4, scoped, tag = 'scoped memory for pallas_linear_small.1']
    %8 = vsyncpa [#allocation3], 0
    // Predicated region
    $region2: #{pallas_linear_small.1} parent=1 // pred_check
      _
    $region3: #{pallas_linear_small.1} parent=1 // pred_check_branch
      %10 = sbr.rel (0) target = $region5
    $region4: #{pallas_linear_small.1} parent=1 // pred_region
      _
    $region5: #{pallas_linear_small.1} parent=1 // pred_fallthru
      _
    // Predicated region
    $region6: #{pallas_linear_small.1} parent=1 // pred_check
      _
    $region7: #{pallas_linear_small.1} parent=1 // pred_check_branch
      %12 = sbr.rel (0) target = $region9
    $region8: #{pallas_linear_small.1} parent=1 // pred_region
      _
    $region9: #{pallas_linear_small.1} parent=1 // pred_fallthru
      _
    // Predicated region
    $region10: #{pallas_linear_small.1} parent=1 // pred_check
      _
    $region11: #{pallas_linear_small.1} parent=1 // pred_check_branch
      %14 = sbr.rel (0) target = $region13
    $region12: #{pallas_linear_small.1} parent=1 // pred_region
      _
    $region13: #{pallas_linear_small.1} parent=1 // pred_fallthru
      _
    %v16 = vld [vmem:[%s0] sm:$0xf]
    %v17 = vld [vmem:[%s0 + $0x4] sm:$0xf]
    %v18 = vld [vmem:[%s1] sm:$0xf]
    %v19 = vld [vmem:[%s1 + $0x4] sm:$0xf]
    %v20 = vld [vmem:[%s1 + $0x8] sm:$0xf]
    %v21 = vld [vmem:[%s1 + $0xc] sm:$0xf]
    %v22 = vld [vmem:[%s2] sm:$0x1]
    %v24 = vlaneseq
    %v25 = vshrl.u32 %v24, 7
    %v26 = vsub.s32 0, %v25
    %v27 = vrot.slane %v22, %v26
    %v31 = vunpack.c.l.b16 %v16
    %v32 = vunpack.c.l.b16 %v17
    %v33 = vpack.c.b16 %v32, %v31
    %v38 = vunpack.c.l.b16 %v18
    %v39 = vunpack.c.l.b16 %v19
    %v40 = vunpack.c.l.b16 %v20
    %v41 = vunpack.c.l.b16 %v21
    %v42 = vpack.c.b16 %v39, %v38
    %v43 = vpack.c.b16 %v41, %v40
    %vm46 = vcmask 261120
    %v48 = vsel %vm46, %v33, 0
    %50 = vmatprep.subr.bf16.mxu0 0
    %51 = vmatpush1.bf16.msra.mxu0 0
    %52 = vmatprep.subr.bf16.mxu0 0
    %53 = vmatpush1.bf16.msra.mxu0 0
    %54 = vmatprep.subr.bf16.mxu0 0
    %55 = vmatpush1.bf16.msra.mxu0 0
    %56 = vmatprep.subr.bf16.mxu0 0
    %57 = vmatpush1.bf16.msra.mxu0 0
    %58 = vmatprep.subr.bf16.mxu0 0
    %59 = vmatpush1.bf16.msra.mxu0 0
    %60 = vmatprep.subr.bf16.mxu0 0
    %61 = vmatpush1.bf16.msra.mxu0 0
    %62 = vmatprep.subr.bf16.mxu0 0
    %63 = vmatpush1.bf16.msra.mxu0 %v43
    %64 = vmatprep.subr.bf16.mxu0 0
    %65 = vmatpush1.bf16.msra.mxu0 %v42
    %66 = vmatprep.subr.bf16.mxu0 0
    %67 = vmatpush2.bf16.msra.mxu0 0
    %68 = vmatprep.subr.bf16.mxu0 0
    %69 = vmatpush2.bf16.msra.mxu0 0
    %70 = vmatprep.subr.bf16.mxu0 0
    %71 = vmatpush2.bf16.msra.mxu0 0
    %72 = vmatprep.subr.bf16.mxu0 0
    %73 = vmatpush2.bf16.msra.mxu0 0
    %74 = vmatprep.subr.bf16.mxu0 0
    %75 = vmatpush2.bf16.msra.mxu0 0
    %76 = vmatprep.subr.bf16.mxu0 0
    %77 = vmatpush2.bf16.msra.mxu0 0
    %78 = vmatprep.subr.bf16.mxu0 0
    %79 = vmatpush2.bf16.msra.mxu0 0
    %80 = vmatprep.subr.bf16.mxu0 0
    %81 = vmatpush2.bf16.msra.mxu0 0
    %82 = vmatprep.mubr.bf16.mxu0 0
    %83 = vmatmul.mubr.bf16.gmra.mxu0 %v48
    %v84 = vpop.f32.mrf.mxu0
    %v85 = vadd.f32 %v27, %v84
    %v86 = vpop.f32.mrf.mxu0
    %v87 = vpop.f32.mrf.mxu0
    %v88 = vadd.f32 %v27, %v87
    %v89 = vpop.f32.mrf.mxu0
    %90 = vdwg.mxu0
    %91 = vst.msk [vmem:[#allocation2] sm:$0xff] %vm46, %v85
    %92 = vst.msk [vmem:[#allocation2 + $0x8] sm:$0xff] %vm46, %v88
    // Predicated region
    $region14: #{pallas_linear_small.1} parent=1 // pred_check
      _
    $region15: #{pallas_linear_small.1} parent=1 // pred_check_branch
      %94 = sbr.rel (0) target = $region17
    $region16: #{pallas_linear_small.1} parent=1 // pred_region
      %s96 = ssub.s32 256, 256
      %97 = vsyncadd [#allocation3], %s96
      %s98 = sshll.u32 [#allocation2], 4
      %s99 = int_to_ptr.vmem [resolvable:$true] %s98
      %104 = dma.vmem_to_hbm [thread:$0]  %s99, 256, %s3, [#allocation3], 128, 128, 8
    $region17: #{pallas_linear_small.1} parent=1 // pred_fallthru
      _
    // Predicated region
    $region18: #{pallas_linear_small.1} parent=1 // pred_check
      _
    $region19: #{pallas_linear_small.1} parent=1 // pred_check_branch
      %106 = sbr.rel (0) target = $region21
    $region20: #{pallas_linear_small.1} parent=1 // pred_region
      %107 = dma.done [#allocation3], 256
    $region21: #{pallas_linear_small.1} parent=1 // pred_fallthru
      _
    %108 = vsyncpa [#allocation3], 1

</llo_original>
